<compile_context>
chip_gen: v6e
topology: v6e:2x2x1
jax: 0.10.0
libtpu: 0.0.40
codegen_flags: <defaults>
</compile_context>

<pallas_src>
import functools

import jax
import jax.numpy as jnp
from jax.experimental import pallas as pl
from jax.experimental.pallas import tpu as pltpu


def _layernorm_kernel(x_ref, w_ref, b_ref, o_ref, *, eps, inv_h):
    # x_ref: (rows_tile, H) ; w_ref/b_ref: (1, H) ; o_ref: (rows_tile, H)
    xf = x_ref[...].astype(jnp.float32)

    # Single reduction sweep: sum(x) and sum(x*x); divide by true H (inv_h).
    sx = jnp.sum(xf, axis=-1, keepdims=True)
    sxx = jnp.sum(xf * xf, axis=-1, keepdims=True)
    mean = sx * inv_h
    var = sxx * inv_h - mean * mean
    var = jnp.maximum(var, 0.0)  # guard tiny negative from cancellation

    inv_std = jax.lax.rsqrt(var + eps)  # EUP; broadcast-multiply afterwards

    w = w_ref[...].astype(jnp.float32)
    b = b_ref[...].astype(jnp.float32)

    # Re-read/upcast x for the normalize+affine phase so the f32 copy used for
    # stats need not stay live across both phases; epilogue is one fused expr.
    x2 = x_ref[...].astype(jnp.float32)
    o_ref[...] = (w * ((x2 - mean) * inv_std) + b).astype(o_ref.dtype)


def _vmem_capacity_bytes():
    """Physical VMEM per TensorCore; default to 128 MiB (v5e/v6e) on failure."""
    try:
        return int(pltpu.get_tpu_info().vmem_capacity_bytes)
    except Exception:
        return 128 << 20


def _pick_rows_per_tile(n_rows, h, tile_budget_bytes, max_rows=8192):
    """Largest row tile (multiple of 8) with one f32 tile <= tile_budget_bytes."""
    # Budget in f32 bytes: the kernel upcasts internally regardless of I/O dtype.
    rows = tile_budget_bytes // max(1, h * 4)
    rows = min(rows, max_rows)
    rows = max(8, (rows // 8) * 8)
    # No point exceeding the (8-rounded) total row count.
    rows = min(rows, max(8, ((n_rows + 7) // 8) * 8))
    return rows


def layer_norm_pallas(x, weight, bias, eps=1e-12, rows_per_tile=None):
    """x: (..., H). weight, bias: (H,). Returns same shape/dtype as x."""
    orig_shape = x.shape
    H = orig_shape[-1]

    x2 = x.reshape(-1, H)
    N = x2.shape[0]

    # Per-generation VMEM budgets.
    vmem_cap = _vmem_capacity_bytes()
    if vmem_cap <= (64 << 20):
        # v7x-class: 64 MiB per TC. Smaller tiles leave headroom for the
        # double-buffered in/out tiles plus Mosaic-materialized f32 temps.
        tile_budget = 4 << 20
        vmem_limit = max(32 << 20, min(56 << 20, vmem_cap - (8 << 20)))
    else:
        # v5e / v6e: 128 MiB physical. Bigger tiles amortize per-step overhead.
        tile_budget = 8 << 20
        vmem_limit = 96 << 20

    if rows_per_tile is None:
        rows_per_tile = _pick_rows_per_tile(N, H, tile_budget)
    rows_per_tile = max(8, (rows_per_tile // 8) * 8)

    # Weight / bias as (1, H) rows; tiny, VMEM-resident across all grid steps.
    w2 = weight.reshape(1, H)
    b2 = bias.reshape(1, H)

    grid = (pl.cdiv(N, rows_per_tile),)  # partial last block handled by Pallas

    kernel = functools.partial(
        _layernorm_kernel, eps=float(eps), inv_h=1.0 / float(H))

    out = pl.pallas_call(
        kernel,
        out_shape=jax.ShapeDtypeStruct((N, H), x.dtype),
        grid_spec=pltpu.PrefetchScalarGridSpec(
            num_scalar_prefetch=0,
            grid=grid,
            in_specs=[
                # Last block dim is the full H (exempt from 128 rule);
                # second-last is a multiple of 8 sublanes.
                pl.BlockSpec((rows_per_tile, H), lambda i: (i, 0)),
                pl.BlockSpec((1, H), lambda i: (0, 0)),   # weight
                pl.BlockSpec((1, H), lambda i: (0, 0)),   # bias
            ],
            out_specs=pl.BlockSpec((rows_per_tile, H), lambda i: (i, 0)),
        ),
        compiler_params=pltpu.CompilerParams(
            dimension_semantics=("parallel",),
            vmem_limit_bytes=int(vmem_limit),
        ),
    )(x2, w2, b2)

    return out.reshape(orig_shape)


def layer_norm_ref(x, weight, bias, eps=1e-12):
    u = jnp.mean(x, axis=-1, keepdims=True)
    s = jnp.mean((x - u) ** 2, axis=-1, keepdims=True)
    o = (x - u) / jnp.sqrt(s + eps)
    return weight * o + bias


if __name__ == "__main__":
    key = jax.random.PRNGKey(0)

    # Case 1: module-default small shape (H=32 < 128 -> full-H lane block,
    # masked stores; single grid step).
    batch, seq, hidden = 2, 8, 32
    k1, k2 = jax.random.split(key)
    x = jax.random.normal(k1, (batch, seq, hidden), dtype=jnp.float32)
    # Parameters as initialized in LayerNorm.__init__: weight=ones, bias=zeros.
    weight = jnp.ones((hidden,), dtype=jnp.float32)
    bias = jnp.zeros((hidden,), dtype=jnp.float32)

    out = layer_norm_pallas(x, weight, bias, eps=1e-12)
    out = jax.block_until_ready(out)
    ref = layer_norm_ref(x, weight, bias, eps=1e-12)
    assert out.shape == x.shape and out.dtype == x.dtype
    assert jnp.allclose(out, ref, atol=1e-5, rtol=1e-5)

    # Case 2: ragged row count (15 rows) + non-trivial weight/bias; a small
    # forced rows_per_tile gives a multi-step grid with a PARTIAL final block
    # (exercises the no-padding / masked-write path).
    b2_, s2_, h2_ = 3, 5, 48
    x2 = jax.random.normal(k2, (b2_, s2_, h2_), dtype=jnp.float32) * 3.0 + 1.5
    w2 = jnp.linspace(0.5, 1.5, h2_, dtype=jnp.float32)
    bb2 = jnp.linspace(-0.2, 0.2, h2_, dtype=jnp.float32)
    out2 = layer_norm_pallas(x2, w2, bb2, eps=1e-12, rows_per_tile=8)
    out2 = jax.block_until_ready(out2)
    ref2 = layer_norm_ref(x2, w2, bb2, eps=1e-12)
    assert out2.shape == x2.shape and out2.dtype == x2.dtype
    assert jnp.allclose(out2, ref2, atol=1e-5, rtol=1e-5)

    print("KERNEL_OK")
</pallas_src>

<mosaic_0001>
module attributes {stable_mosaic.version = 11 : i64} {
  func.func @_layernorm_kernel(%arg0: i32, %arg1: memref<16x32xf32, #tpu.memory_space<vmem>>, %arg2: memref<1x32xf32, #tpu.memory_space<vmem>>, %arg3: memref<1x32xf32, #tpu.memory_space<vmem>>, %arg4: memref<16x32xf32, #tpu.memory_space<vmem>>) attributes {dimension_semantics = [#tpu.dimension_semantics<parallel>], iteration_bounds = array<i64: 1>, scalar_prefetch = 0 : i64, scratch_operands = 0 : i64, tpu.core_type = #tpu.core_type<tc>, window_params = [{transform_indices = @transform_0, window_bounds = array<i64: 16, 32>}, {pipeline_mode = #tpu.pipeline_mode<synchronous>, transform_indices = @transform_1, window_bounds = array<i64: 1, 32>}, {pipeline_mode = #tpu.pipeline_mode<synchronous>, transform_indices = @transform_2, window_bounds = array<i64: 1, 32>}, {transform_indices = @transform_3, window_bounds = array<i64: 16, 32>}]} {
    %c0 = arith.constant 0 : index
    %c0_0 = arith.constant 0 : index
    %0 = vector.load %arg1[%c0, %c0_0] : memref<16x32xf32, #tpu.memory_space<vmem>>, vector<16x32xf32>
    %cst = arith.constant dense<0.000000e+00> : vector<16xf32>
    %1 = vector.multi_reduction <add>, %0, %cst [1] : vector<16x32xf32> to vector<16xf32>
    %2 = vector.shape_cast %1 : vector<16xf32> to vector<16x1xf32>
    %3 = arith.mulf %0, %0 : vector<16x32xf32>
    %cst_1 = arith.constant dense<0.000000e+00> : vector<16xf32>
    %4 = vector.multi_reduction <add>, %3, %cst_1 [1] : vector<16x32xf32> to vector<16xf32>
    %5 = vector.shape_cast %4 : vector<16xf32> to vector<16x1xf32>
    %cst_2 = arith.constant 3.125000e-02 : f32
    %6 = vector.broadcast %cst_2 : f32 to vector<16x1xf32>
    %7 = arith.mulf %2, %6 : vector<16x1xf32>
    %cst_3 = arith.constant 3.125000e-02 : f32
    %8 = vector.broadcast %cst_3 : f32 to vector<16x1xf32>
    %9 = arith.mulf %5, %8 : vector<16x1xf32>
    %10 = arith.mulf %7, %7 : vector<16x1xf32>
    %11 = arith.subf %9, %10 : vector<16x1xf32>
    %cst_4 = arith.constant 0.000000e+00 : f32
    %12 = vector.broadcast %cst_4 : f32 to vector<16x1xf32>
    %13 = arith.maximumf %11, %12 : vector<16x1xf32>
    %cst_5 = arith.constant 9.99999996E-13 : f32
    %14 = vector.broadcast %cst_5 : f32 to vector<16x1xf32>
    %15 = arith.addf %13, %14 : vector<16x1xf32>
    %16 = math.rsqrt %15 : vector<16x1xf32>
    %c0_6 = arith.constant 0 : index
    %c0_7 = arith.constant 0 : index
    %17 = vector.load %arg2[%c0_6, %c0_7] : memref<1x32xf32, #tpu.memory_space<vmem>>, vector<1x32xf32>
    %c0_8 = arith.constant 0 : index
    %c0_9 = arith.constant 0 : index
    %18 = vector.load %arg3[%c0_8, %c0_9] : memref<1x32xf32, #tpu.memory_space<vmem>>, vector<1x32xf32>
    %c0_10 = arith.constant 0 : index
    %c0_11 = arith.constant 0 : index
    %19 = vector.load %arg1[%c0_10, %c0_11] : memref<16x32xf32, #tpu.memory_space<vmem>>, vector<16x32xf32>
    %20 = vector.broadcast %7 : vector<16x1xf32> to vector<16x32xf32>
    %21 = arith.subf %19, %20 : vector<16x32xf32>
    %22 = vector.broadcast %16 : vector<16x1xf32> to vector<16x32xf32>
    %23 = arith.mulf %21, %22 : vector<16x32xf32>
    %24 = vector.broadcast %17 : vector<1x32xf32> to vector<16x32xf32>
    %25 = arith.mulf %24, %23 : vector<16x32xf32>
    %26 = vector.broadcast %18 : vector<1x32xf32> to vector<16x32xf32>
    %27 = arith.addf %25, %26 : vector<16x32xf32>
    %c0_12 = arith.constant 0 : index
    %c0_13 = arith.constant 0 : index
    %28 = vector.load %arg4[%c0_12, %c0_13] : memref<16x32xf32, #tpu.memory_space<vmem>>, vector<16x32xf32>
    tpu.vector_store %arg4[%c0_12, %c0_13], %27 {strides = array<i32>} : memref<16x32xf32, #tpu.memory_space<vmem>>, vector<16x32xf32>,
    return
  }
  func.func @transform_0(%arg0: i32) -> (i32, i32) {
    %c0_i32 = arith.constant 0 : i32
    %c0_i32_0 = arith.constant 0 : i32
    return %arg0, %c0_i32 : i32, i32
  }
  func.func @transform_1(%arg0: i32) -> (i32, i32) {
    %c0_i32 = arith.constant 0 : i32
    %c0_i32_0 = arith.constant 0 : i32
    %c0_i32_1 = arith.constant 0 : i32
    return %c0_i32, %c0_i32_0 : i32, i32
  }
  func.func @transform_2(%arg0: i32) -> (i32, i32) {
    %c0_i32 = arith.constant 0 : i32
    %c0_i32_0 = arith.constant 0 : i32
    %c0_i32_1 = arith.constant 0 : i32
    return %c0_i32, %c0_i32_0 : i32, i32
  }
  func.func @transform_3(%arg0: i32) -> (i32, i32) {
    %c0_i32 = arith.constant 0 : i32
    %c0_i32_0 = arith.constant 0 : i32
    return %arg0, %c0_i32 : i32, i32
  }
}

</mosaic_0001>

<llo_original>
// kernel: tpu_custom_call.1
$region0: #{tpu_custom_call.1}
  #allocation0 [shape = 'u32[]', space=smem, size = 0x4, offset = 0x4, fixed_abs, tag = 'smem constant byte address 0x4 - core index']
  #allocation1 [shape = 'u32[144,128]{1,0:T(1,128)}', space=vmem, size = 0x12000, scoped, tag = 'internal scratch']
  %s0 = inlined_call_operand.hbm [shape: f32[16,32], index: 0, kind: input, shape index: {}]
  %s1 = inlined_call_operand.vmem [shape: f32[1,32], index: 1, kind: input, shape index: {}]
  %s2 = inlined_call_operand.vmem [shape: f32[1,32], index: 2, kind: input, shape index: {}]
  %s3 = inlined_call_operand.hbm [shape: f32[16,32], index: 3, kind: output, shape index: {}]
  %s4 = sld [smem:[#allocation0]]
  $region26: #{tpu_custom_call.1} parent=0
    _
  %s6 = ssub.s32 1, %s4
  %s7 = scalar_select 0, %s6, %s4
  $region1: #{tpu_custom_call.1} parent=0
    #allocation2 [shape = 'u8[8192]{0}', space=vmem, size = 0x2000, scoped, tag = 'input window, operand 0, single buffered']
    #allocation3 [shape = 's32[1]{0}', space=sflag, size = 0x4, scoped, tag = 'scoped memory for tpu_custom_call.1']
    #allocation4 [shape = 's32[1]{0}', space=sflag, size = 0x4, scoped, tag = 'scoped memory for tpu_custom_call.1']
    #allocation5 [shape = 'u8[8192]{0}', space=vmem, size = 0x2000, scoped, tag = 'output window, operand 0, single buffered']
    %8 = vsyncpa [#allocation3], 0
    %9 = vsyncpa [#allocation4], 0
    // Predicated region
    $region2: #{tpu_custom_call.1} parent=1 // pred_check
      _
    $region3: #{tpu_custom_call.1} parent=1 // pred_check_branch
      %11 = sbr.rel (0) target = $region5
    $region4: #{tpu_custom_call.1} parent=1 // pred_region
      %s13 = ssub.s32 256, 256
      %14 = vsyncadd [#allocation3], %s13
      %s15 = sshll.u32 [#allocation2], 4
      %s16 = int_to_ptr.vmem [resolvable:$true] %s15
      %21 = dma.hbm_to_vmem [thread:$0]  %s0, 256, %s16, [#allocation3], 128, 128, 8
    $region5: #{tpu_custom_call.1} parent=1 // pred_fallthru
      _
    // Predicated region
    $region6: #{tpu_custom_call.1} parent=1 // pred_check
      _
    $region7: #{tpu_custom_call.1} parent=1 // pred_check_branch
      %23 = sbr.rel (0) target = $region9
    $region8: #{tpu_custom_call.1} parent=1 // pred_region
      _
    $region9: #{tpu_custom_call.1} parent=1 // pred_fallthru
      _
    // Predicated region
    $region10: #{tpu_custom_call.1} parent=1 // pred_check
      _
    $region11: #{tpu_custom_call.1} parent=1 // pred_check_branch
      %25 = sbr.rel (0) target = $region13
    $region12: #{tpu_custom_call.1} parent=1 // pred_region
      _
    $region13: #{tpu_custom_call.1} parent=1 // pred_fallthru
      _
    // Predicated region
    $region14: #{tpu_custom_call.1} parent=1 // pred_check
      _
    $region15: #{tpu_custom_call.1} parent=1 // pred_check_branch
      %27 = sbr.rel (0) target = $region17
    $region16: #{tpu_custom_call.1} parent=1 // pred_region
      %28 = dma.done [#allocation3], 256
    $region17: #{tpu_custom_call.1} parent=1 // pred_fallthru
      _
    %v29 = vld [vmem:[#allocation2] sm:$0xff]
    %v30 = vld [vmem:[#allocation2 + $0x8] sm:$0xff]
    %vm31 = vcmask 261120
    %v32 = vsel %vm31, %v29, 0.0
    %33 = vadd.xlane.f32.xlu0 %v32
    %v34 = vpop.xlane.xlu0 %33
    %v35 = vsel %vm31, %v30, 0.0
    %36 = vadd.xlane.f32.xlu0 %v35
    %v37 = vpop.xlane.xlu0 %36
    %v38 = vmul.f32 %v29, %v29
    %v39 = vmul.f32 %v30, %v30
    %v40 = vsel %vm31, %v38, 0.0
    %41 = vadd.xlane.f32.xlu0 %v40
    %v42 = vpop.xlane.xlu0 %41
    %v43 = vsel %vm31, %v39, 0.0
    %44 = vadd.xlane.f32.xlu0 %v43
    %v45 = vpop.xlane.xlu0 %44
    %v46 = vmul.f32 %v34, 0.03125
    %v47 = vmul.f32 %v37, 0.03125
    %v48 = vmul.f32 %v42, 0.03125
    %v49 = vmul.f32 %v45, 0.03125
    %v50 = vmul.f32 %v46, %v46
    %v51 = vmul.f32 %v47, %v47
    %v52 = vsub.f32 %v48, %v50
    %v53 = vsub.f32 %v49, %v51
    %v54 = vmax.f32 %v52, 0.0
    %v55 = vmax.f32 %v53, 0.0
    %v56 = vadd.f32 %v54, 1e-12
    %v57 = vadd.f32 %v55, 1e-12
    %v58 = vrsqrt.pop %v56
    %v59 = vrsqrt.pop %v57
    %v60 = vld [vmem:[%s1] sm:$0x1]
    %v61 = vld [vmem:[%s2] sm:$0x1]
    %v62 = vsub.f32 %v29, %v46
    %v63 = vsub.f32 %v30, %v47
    %v64 = vmul.f32 %v62, %v58
    %v65 = vmul.f32 %v63, %v59
    %v67 = vlaneseq
    %v68 = vshrl.u32 %v67, 7
    %v69 = vsub.s32 0, %v68
    %v70 = vrot.slane %v60, %v69
    %v72 = vmul.f32 %v70, %v64
    %v73 = vmul.f32 %v70, %v65
    %v75 = vlaneseq
    %v76 = vshrl.u32 %v75, 7
    %v77 = vsub.s32 0, %v76
    %v78 = vrot.slane %v61, %v77
    %v80 = vadd.f32 %v72, %v78
    %v81 = vadd.f32 %v73, %v78
    %82 = vst.msk [vmem:[#allocation5] sm:$0xff] %vm31, %v80
    %83 = vst.msk [vmem:[#allocation5 + $0x8] sm:$0xff] %vm31, %v81
    // Predicated region
    $region18: #{tpu_custom_call.1} parent=1 // pred_check
      _
    $region19: #{tpu_custom_call.1} parent=1 // pred_check_branch
      %85 = sbr.rel (0) target = $region21
    $region20: #{tpu_custom_call.1} parent=1 // pred_region
      %s87 = ssub.s32 256, 256
      %88 = vsyncadd [#allocation4], %s87
      %s89 = sshll.u32 [#allocation5], 4
      %s90 = int_to_ptr.vmem [resolvable:$true] %s89
      %95 = dma.vmem_to_hbm [thread:$0]  %s90, 256, %s3, [#allocation4], 128, 128, 8
    $region21: #{tpu_custom_call.1} parent=1 // pred_fallthru
      _
    // Predicated region
    $region22: #{tpu_custom_call.1} parent=1 // pred_check
      _
    $region23: #{tpu_custom_call.1} parent=1 // pred_check_branch
      %97 = sbr.rel (0) target = $region25
    $region24: #{tpu_custom_call.1} parent=1 // pred_region
      %98 = dma.done [#allocation4], 256
    $region25: #{tpu_custom_call.1} parent=1 // pred_fallthru
      _
    %99 = vsyncpa [#allocation3], 1
    %100 = vsyncpa [#allocation4], 1

</llo_original>
